<compile_context>
chip_gen: v7x
topology: tpu7x:2x2x1
jax: 0.10.0
libtpu: 0.0.40
codegen_flags: <defaults>
</compile_context>

<pallas_src>
import jax
import jax.numpy as jnp
from jax.experimental import pallas as pl
from jax.experimental.pallas import tpu as pltpu


OUT_PAD = 128  # lane-dense padded width for the 2-logit fc3 output


# --------------------------------------------------------------------------
# Kernel
# --------------------------------------------------------------------------
def _mlp_kernel(x1_ref, x2_ref,
                w1a_ref, w1b_ref, b1_ref,
                w2_ref, b2_ref,
                w3_ref, b3_ref,
                o_ref):
    """Fused (concat +) fc1/relu + fc2/relu + fc3/relu on one (tb, F) tile.

    torch.cat((x1, x2), dim=1) @ W1  ==  x1 @ W1[:F] + x2 @ W1[F:], so the
    concat never materializes: the two partial products accumulate in f32.
    """
    # Inputs stream in as f32 (single HBM pass); cast to bf16 right before
    # the dots so the MXU runs at bf16 rate without a standalone XLA astype.
    x1b = x1_ref[...].astype(jnp.bfloat16)
    x2b = x2_ref[...].astype(jnp.bfloat16)

    # fc1 + relu (bf16 operands, f32 accumulation / elementwise).
    h1 = jnp.dot(x1b, w1a_ref[...], preferred_element_type=jnp.float32)
    h1 = h1 + jnp.dot(x2b, w1b_ref[...], preferred_element_type=jnp.float32)
    h1 = jnp.maximum(h1 + b1_ref[...], 0.0)

    # fc2 + relu
    h2 = jnp.dot(h1.astype(jnp.bfloat16), w2_ref[...],
                 preferred_element_type=jnp.float32)
    h2 = jnp.maximum(h2 + b2_ref[...], 0.0)

    # fc3 + relu, folded into a lane-dense (H2, 128) weight: columns >= 2 are
    # zero, relu keeps them exactly 0, and the wrapper slices them away.
    h3 = jnp.dot(h2.astype(jnp.bfloat16), w3_ref[...],
                 preferred_element_type=jnp.float32)
    h3 = jnp.maximum(h3 + b3_ref[...], 0.0)

    o_ref[...] = h3.astype(o_ref.dtype)


# --------------------------------------------------------------------------
# Sizing helpers
# --------------------------------------------------------------------------
def _vmem_budget_bytes():
    """Usable VMEM budget for this generation (headroom under physical cap)."""
    try:
        cap = int(pltpu.get_tpu_info().vmem_capacity_bytes)
    except Exception:
        cap = 64 << 20  # conservative (v7x-sized) fallback
    return int(cap * 0.85)


def _round_down_16(x):
    return max(16, (int(x) // 16) * 16)


def _pick_batch_tile(B, weight_bytes, per_row_bytes, vmem_budget):
    """Largest batch tile (multiple of 16, <= 512) whose working set fits the
    VMEM budget; B >= 32 is capped to B//2 so the grid has >= 2 steps (keeps
    both v7x TensorCores busy via the 'parallel' grid axis)."""
    headroom = 4 << 20  # compiler-internal scratch slack
    avail = max(vmem_budget - weight_bytes - headroom, 16 * per_row_bytes)
    tb = min(avail // per_row_bytes, 512)
    if B >= 32:
        tb = min(tb, B // 2)
    tb = min(tb, max(B, 16))
    return _round_down_16(tb)


# --------------------------------------------------------------------------
# Parameter preparation (one-time, outside the hot path)
# --------------------------------------------------------------------------
def prepare_params(params):
    """Split W1, cast matmul weights to bf16, pad fc3 to a lane-dense slab."""
    w1, b1, w2, b2, w3, b3 = params
    F = w1.shape[0] // 2
    H1 = w1.shape[1]
    H2 = w2.shape[1]
    OUT = w3.shape[1]
    return dict(
        F=F, H1=H1, H2=H2, out=OUT,
        w1a=w1[:F].astype(jnp.bfloat16),
        w1b=w1[F:].astype(jnp.bfloat16),
        b1=b1.reshape(1, H1).astype(jnp.float32),
        w2=w2.astype(jnp.bfloat16),
        b2=b2.reshape(1, H2).astype(jnp.float32),
        w3=jnp.zeros((H2, OUT_PAD), jnp.bfloat16).at[:, :OUT].set(
            w3.astype(jnp.bfloat16)),
        b3=jnp.zeros((1, OUT_PAD), jnp.float32).at[:, :OUT].set(
            b3.reshape(1, OUT).astype(jnp.float32)),
    )


# --------------------------------------------------------------------------
# pallas_call builder + forward wrapper
# --------------------------------------------------------------------------
def _make_call(F, H1, H2, tb, n_tiles, out_dtype, vmem_limit, cost,
               single_buffered):
    def const(shape):
        if single_buffered:
            return pl.BlockSpec(shape, lambda i: (0, 0),
                                pipeline_mode=pl.Buffered(1))
        return pl.BlockSpec(shape, lambda i: (0, 0))

    return pl.pallas_call(
        _mlp_kernel,
        out_shape=jax.ShapeDtypeStruct((n_tiles * tb, OUT_PAD), out_dtype),
        grid_spec=pltpu.PrefetchScalarGridSpec(
            num_scalar_prefetch=0,
            grid=(n_tiles,),
            in_specs=[
                pl.BlockSpec((tb, F), lambda i: (i, 0)),   # x1 tile
                pl.BlockSpec((tb, F), lambda i: (i, 0)),   # x2 tile
                const((F, H1)),                            # W1[:F]   (resident)
                const((F, H1)),                            # W1[F:]   (resident)
                const((1, H1)),                            # b1
                const((H1, H2)),                           # W2
                const((1, H2)),                            # b2
                const((H2, OUT_PAD)),                      # W3 (padded)
                const((1, OUT_PAD)),                       # b3 (padded)
            ],
            out_specs=pl.BlockSpec((tb, OUT_PAD), lambda i: (i, 0)),
        ),
        compiler_params=pltpu.CompilerParams(
            dimension_semantics=("parallel",),
            vmem_limit_bytes=int(vmem_limit)),
        cost_estimate=cost,
    )


def class_differentiator_forward(x1, x2, prepared, *, batch_tile=None):
    """Fused Pallas forward. x1, x2: (B, feat_dim). Returns (B, 2) float32."""
    F, H1, H2, OUT = prepared["F"], prepared["H1"], prepared["H2"], prepared["out"]
    B = x1.shape[0]
    assert x1.shape == (B, F) and x2.shape == (B, F), (x1.shape, x2.shape, F)

    # bf16 writeback halves the padded-output traffic in the small-F,
    # mem-bound regime; at large F the padding is noise, keep f32 there.
    out_dtype = jnp.float32 if F >= 2048 else jnp.bfloat16
    out_bytes = 4 if out_dtype == jnp.float32 else 2

    # Resident (single-buffered) weights/biases + per-row streaming footprint
    # (f32 inputs and padded output, double-buffered by the pipeline).
    weight_bytes = (2 * F * H1 * 2 + H1 * H2 * 2 + H2 * OUT_PAD * 2
                    + (H1 + H2 + OUT_PAD) * 4)
    per_row = 2 * (2 * F * 4) + 2 * (OUT_PAD * out_bytes)

    budget = _vmem_budget_bytes()
    tb = batch_tile if batch_tile is not None else _pick_batch_tile(
        B, weight_bytes, per_row, budget)
    assert tb % 8 == 0, tb

    # Pad the batch to a tile multiple (handles awkward B and B < 16).
    n_tiles = pl.cdiv(B, tb)
    B_pad = n_tiles * tb
    x1 = x1.astype(jnp.float32)
    x2 = x2.astype(jnp.float32)
    if B_pad != B:
        pad = ((0, B_pad - B), (0, 0))
        x1 = jnp.pad(x1, pad)
        x2 = jnp.pad(x2, pad)

    flops = 2 * B_pad * (2 * F * H1 + H1 * H2 + H2 * OUT_PAD)
    bytes_accessed = (2 * B_pad * F * 4         # x1 + x2 streams (f32)
                      + weight_bytes            # resident weights/biases
                      + B_pad * OUT_PAD * out_bytes)
    cost = pl.CostEstimate(flops=flops, transcendentals=0,
                           bytes_accessed=bytes_accessed)

    vmem_limit = min(budget, weight_bytes + per_row * tb + (8 << 20))

    args = (x1, x2,
            prepared["w1a"], prepared["w1b"], prepared["b1"],
            prepared["w2"], prepared["b2"],
            prepared["w3"], prepared["b3"])

    try:
        out_padded = _make_call(F, H1, H2, tb, n_tiles, out_dtype, vmem_limit,
                                cost, single_buffered=True)(*args)
    except Exception:
        # Fallback if this JAX build rejects Buffered(1) for constant blocks.
        out_padded = _make_call(F, H1, H2, tb, n_tiles, out_dtype, vmem_limit,
                                cost, single_buffered=False)(*args)

    # Drop batch padding and zero lane-padding columns; return f32 logits.
    return out_padded[:B, :OUT].astype(jnp.float32)


# --------------------------------------------------------------------------
# Reference + synthetic init
# --------------------------------------------------------------------------
def init_params(key, feat_dim):
    """Deterministic synthetic init matching nn.Linear shapes (stored transposed)."""
    H1 = feat_dim // 4
    H2 = feat_dim // 16
    ks = jax.random.split(key, 6)
    w1 = jax.random.normal(ks[0], (2 * feat_dim, H1), jnp.float32) * 0.05
    b1 = jax.random.normal(ks[1], (1, H1), jnp.float32) * 0.05
    w2 = jax.random.normal(ks[2], (H1, H2), jnp.float32) * 0.05
    b2 = jax.random.normal(ks[3], (1, H2), jnp.float32) * 0.05
    w3 = jax.random.normal(ks[4], (H2, 2), jnp.float32) * 0.05
    b3 = jax.random.normal(ks[5], (1, 2), jnp.float32) * 0.05
    return (w1, b1, w2, b2, w3, b3)


def reference_forward(x1, x2, params):
    w1, b1, w2, b2, w3, b3 = params
    x = jnp.concatenate([x1, x2], axis=1)
    x = jax.nn.relu(x @ w1 + b1)
    x = jax.nn.relu(x @ w2 + b2)
    x = jax.nn.relu(x @ w3 + b3)
    return x


# --------------------------------------------------------------------------
# Self-test (small shapes consistent with the module)
# --------------------------------------------------------------------------
if __name__ == "__main__":
    # feat_dim=128 -> fc1: 256->32, fc2: 32->8, fc3: 8->2.
    feat_dim = 128

    key = jax.random.PRNGKey(0)
    k1, k2, kp = jax.random.split(key, 3)
    raw_params = init_params(kp, feat_dim)
    prepared = prepare_params(raw_params)

    def check(batch, seed):
        ka, kb = jax.random.split(jax.random.PRNGKey(seed))
        x1 = jax.random.normal(ka, (batch, feat_dim), jnp.float32)
        x2 = jax.random.normal(kb, (batch, feat_dim), jnp.float32)
        out = jax.block_until_ready(
            class_differentiator_forward(x1, x2, prepared))
        ref = reference_forward(x1, x2, raw_params)
        assert out.shape == (batch, 2), out.shape
        # bf16 matmul operands / bf16 writeback with f32 accumulation.
        assert jnp.allclose(out, ref, atol=2e-2, rtol=2e-2), (
            f"B={batch}: max abs diff {jnp.max(jnp.abs(out - ref))}")

    check(8, seed=0)    # tiny batch: padded up to one 16-row tile
    check(64, seed=1)   # clean multi-tile grid (>= 2 steps, resident weights)
    check(40, seed=2)   # awkward batch: tile=16, padded to 48, 3 grid steps

    print("KERNEL_OK")
</pallas_src>

<mosaic_0001>
module attributes {stable_mosaic.version = 11 : i64} {
  func.func @_mlp_kernel(%arg0: i32, %arg1: memref<16x128xf32, #tpu.memory_space<vmem>>, %arg2: memref<16x128xf32, #tpu.memory_space<vmem>>, %arg3: memref<128x32xbf16, #tpu.memory_space<vmem>>, %arg4: memref<128x32xbf16, #tpu.memory_space<vmem>>, %arg5: memref<1x32xf32, #tpu.memory_space<vmem>>, %arg6: memref<32x8xbf16, #tpu.memory_space<vmem>>, %arg7: memref<1x8xf32, #tpu.memory_space<vmem>>, %arg8: memref<8x128xbf16, #tpu.memory_space<vmem>>, %arg9: memref<1x128xf32, #tpu.memory_space<vmem>>, %arg10: memref<16x128xbf16, #tpu.memory_space<vmem>>) attributes {dimension_semantics = [#tpu.dimension_semantics<parallel>], iteration_bounds = array<i64: 1>, scalar_prefetch = 0 : i64, scratch_operands = 0 : i64, tpu.core_type = #tpu.core_type<tc>, window_params = [{transform_indices = @transform_0, window_bounds = array<i64: 16, 128>}, {transform_indices = @transform_1, window_bounds = array<i64: 16, 128>}, {pipeline_mode = #tpu.pipeline_mode<synchronous>, transform_indices = @transform_2, window_bounds = array<i64: 128, 32>}, {pipeline_mode = #tpu.pipeline_mode<synchronous>, transform_indices = @transform_3, window_bounds = array<i64: 128, 32>}, {pipeline_mode = #tpu.pipeline_mode<synchronous>, transform_indices = @transform_4, window_bounds = array<i64: 1, 32>}, {pipeline_mode = #tpu.pipeline_mode<synchronous>, transform_indices = @transform_5, window_bounds = array<i64: 32, 8>}, {pipeline_mode = #tpu.pipeline_mode<synchronous>, transform_indices = @transform_6, window_bounds = array<i64: 1, 8>}, {pipeline_mode = #tpu.pipeline_mode<synchronous>, transform_indices = @transform_7, window_bounds = array<i64: 8, 128>}, {pipeline_mode = #tpu.pipeline_mode<synchronous>, transform_indices = @transform_8, window_bounds = array<i64: 1, 128>}, {transform_indices = @transform_9, window_bounds = array<i64: 16, 128>}]} {
    %c0 = arith.constant 0 : index
    %c0_0 = arith.constant 0 : index
    %0 = vector.load %arg1[%c0, %c0_0] : memref<16x128xf32, #tpu.memory_space<vmem>>, vector<16x128xf32>
    %1 = arith.truncf %0 : vector<16x128xf32> to vector<16x128xbf16>
    %c0_1 = arith.constant 0 : index
    %c0_2 = arith.constant 0 : index
    %2 = vector.load %arg2[%c0_1, %c0_2] : memref<16x128xf32, #tpu.memory_space<vmem>>, vector<16x128xf32>
    %3 = arith.truncf %2 : vector<16x128xf32> to vector<16x128xbf16>
    %c0_3 = arith.constant 0 : index
    %c0_4 = arith.constant 0 : index
    %4 = vector.load %arg3[%c0_3, %c0_4] : memref<128x32xbf16, #tpu.memory_space<vmem>>, vector<128x32xbf16>
    %cst = arith.constant dense<0.000000e+00> : vector<16x32xf32>
    %5 = tpu.matmul %1, %4, %cst {dimension_numbers = #tpu.dot_dimension_numbers<[1], [0], [0], [1], [0, 0, 1, 1], [], []>} : vector<16x128xbf16>, vector<128x32xbf16>, vector<16x32xf32> -> vector<16x32xf32>
    %c0_5 = arith.constant 0 : index
    %c0_6 = arith.constant 0 : index
    %6 = vector.load %arg4[%c0_5, %c0_6] : memref<128x32xbf16, #tpu.memory_space<vmem>>, vector<128x32xbf16>
    %cst_7 = arith.constant dense<0.000000e+00> : vector<16x32xf32>
    %7 = tpu.matmul %3, %6, %cst_7 {dimension_numbers = #tpu.dot_dimension_numbers<[1], [0], [0], [1], [0, 0, 1, 1], [], []>} : vector<16x128xbf16>, vector<128x32xbf16>, vector<16x32xf32> -> vector<16x32xf32>
    %8 = arith.addf %5, %7 : vector<16x32xf32>
    %c0_8 = arith.constant 0 : index
    %c0_9 = arith.constant 0 : index
    %9 = vector.load %arg5[%c0_8, %c0_9] : memref<1x32xf32, #tpu.memory_space<vmem>>, vector<1x32xf32>
    %10 = vector.broadcast %9 : vector<1x32xf32> to vector<16x32xf32>
    %11 = arith.addf %8, %10 : vector<16x32xf32>
    %cst_10 = arith.constant 0.000000e+00 : f32
    %12 = vector.broadcast %cst_10 : f32 to vector<16x32xf32>
    %13 = arith.maximumf %11, %12 : vector<16x32xf32>
    %14 = arith.truncf %13 : vector<16x32xf32> to vector<16x32xbf16>
    %c0_11 = arith.constant 0 : index
    %c0_12 = arith.constant 0 : index
    %15 = vector.load %arg6[%c0_11, %c0_12] : memref<32x8xbf16, #tpu.memory_space<vmem>>, vector<32x8xbf16>
    %cst_13 = arith.constant dense<0.000000e+00> : vector<16x8xf32>
    %16 = tpu.matmul %14, %15, %cst_13 {dimension_numbers = #tpu.dot_dimension_numbers<[1], [0], [0], [1], [0, 0, 1, 1], [], []>} : vector<16x32xbf16>, vector<32x8xbf16>, vector<16x8xf32> -> vector<16x8xf32>
    %c0_14 = arith.constant 0 : index
    %c0_15 = arith.constant 0 : index
    %17 = vector.load %arg7[%c0_14, %c0_15] : memref<1x8xf32, #tpu.memory_space<vmem>>, vector<1x8xf32>
    %18 = vector.broadcast %17 : vector<1x8xf32> to vector<16x8xf32>
    %19 = arith.addf %16, %18 : vector<16x8xf32>
    %cst_16 = arith.constant 0.000000e+00 : f32
    %20 = vector.broadcast %cst_16 : f32 to vector<16x8xf32>
    %21 = arith.maximumf %19, %20 : vector<16x8xf32>
    %22 = arith.truncf %21 : vector<16x8xf32> to vector<16x8xbf16>
    %c0_17 = arith.constant 0 : index
    %c0_18 = arith.constant 0 : index
    %23 = vector.load %arg8[%c0_17, %c0_18] : memref<8x128xbf16, #tpu.memory_space<vmem>>, vector<8x128xbf16>
    %cst_19 = arith.constant dense<0.000000e+00> : vector<16x128xf32>
    %24 = tpu.matmul %22, %23, %cst_19 {dimension_numbers = #tpu.dot_dimension_numbers<[1], [0], [0], [1], [0, 0, 1, 1], [], []>} : vector<16x8xbf16>, vector<8x128xbf16>, vector<16x128xf32> -> vector<16x128xf32>
    %c0_20 = arith.constant 0 : index
    %c0_21 = arith.constant 0 : index
    %25 = vector.load %arg9[%c0_20, %c0_21] : memref<1x128xf32, #tpu.memory_space<vmem>>, vector<1x128xf32>
    %26 = vector.broadcast %25 : vector<1x128xf32> to vector<16x128xf32>
    %27 = arith.addf %24, %26 : vector<16x128xf32>
    %cst_22 = arith.constant 0.000000e+00 : f32
    %28 = vector.broadcast %cst_22 : f32 to vector<16x128xf32>
    %29 = arith.maximumf %27, %28 : vector<16x128xf32>
    %30 = arith.truncf %29 : vector<16x128xf32> to vector<16x128xbf16>
    %c0_23 = arith.constant 0 : index
    %c0_24 = arith.constant 0 : index
    %31 = vector.load %arg10[%c0_23, %c0_24] : memref<16x128xbf16, #tpu.memory_space<vmem>>, vector<16x128xbf16>
    tpu.vector_store %arg10[%c0_23, %c0_24], %30 {strides = array<i32>} : memref<16x128xbf16, #tpu.memory_space<vmem>>, vector<16x128xbf16>,
    return
  }
  func.func @transform_0(%arg0: i32) -> (i32, i32) {
    %c0_i32 = arith.constant 0 : i32
    %c0_i32_0 = arith.constant 0 : i32
    return %arg0, %c0_i32 : i32, i32
  }
  func.func @transform_1(%arg0: i32) -> (i32, i32) {
    %c0_i32 = arith.constant 0 : i32
    %c0_i32_0 = arith.constant 0 : i32
    return %arg0, %c0_i32 : i32, i32
  }
  func.func @transform_2(%arg0: i32) -> (i32, i32) {
    %c0_i32 = arith.constant 0 : i32
    %c0_i32_0 = arith.constant 0 : i32
    %c0_i32_1 = arith.constant 0 : i32
    return %c0_i32, %c0_i32_0 : i32, i32
  }
  func.func @transform_3(%arg0: i32) -> (i32, i32) {
    %c0_i32 = arith.constant 0 : i32
    %c0_i32_0 = arith.constant 0 : i32
    %c0_i32_1 = arith.constant 0 : i32
    return %c0_i32, %c0_i32_0 : i32, i32
  }
  func.func @transform_4(%arg0: i32) -> (i32, i32) {
    %c0_i32 = arith.constant 0 : i32
    %c0_i32_0 = arith.constant 0 : i32
    %c0_i32_1 = arith.constant 0 : i32
    return %c0_i32, %c0_i32_0 : i32, i32
  }
  func.func @transform_5(%arg0: i32) -> (i32, i32) {
    %c0_i32 = arith.constant 0 : i32
    %c0_i32_0 = arith.constant 0 : i32
    %c0_i32_1 = arith.constant 0 : i32
    return %c0_i32, %c0_i32_0 : i32, i32
  }
  func.func @transform_6(%arg0: i32) -> (i32, i32) {
    %c0_i32 = arith.constant 0 : i32
    %c0_i32_0 = arith.constant 0 : i32
    %c0_i32_1 = arith.constant 0 : i32
    return %c0_i32, %c0_i32_0 : i32, i32
  }
  func.func @transform_7(%arg0: i32) -> (i32, i32) {
    %c0_i32 = arith.constant 0 : i32
    %c0_i32_0 = arith.constant 0 : i32
    %c0_i32_1 = arith.constant 0 : i32
    return %c0_i32, %c0_i32_0 : i32, i32
  }
  func.func @transform_8(%arg0: i32) -> (i32, i32) {
    %c0_i32 = arith.constant 0 : i32
    %c0_i32_0 = arith.constant 0 : i32
    %c0_i32_1 = arith.constant 0 : i32
    return %c0_i32, %c0_i32_0 : i32, i32
  }
  func.func @transform_9(%arg0: i32) -> (i32, i32) {
    %c0_i32 = arith.constant 0 : i32
    %c0_i32_0 = arith.constant 0 : i32
    return %arg0, %c0_i32 : i32, i32
  }
}

module attributes {stable_mosaic.version = 11 : i64} {
  func.func @_mlp_kernel(%arg0: i32, %arg1: memref<16x128xf32, #tpu.memory_space<vmem>>, %arg2: memref<16x128xf32, #tpu.memory_space<vmem>>, %arg3: memref<128x32xbf16, #tpu.memory_space<vmem>>, %arg4: memref<128x32xbf16, #tpu.memory_space<vmem>>, %arg5: memref<1x32xf32, #tpu.memory_space<vmem>>, %arg6: memref<32x8xbf16, #tpu.memory_space<vmem>>, %arg7: memref<1x8xf32, #tpu.memory_space<vmem>>, %arg8: memref<8x128xbf16, #tpu.memory_space<vmem>>, %arg9: memref<1x128xf32, #tpu.memory_space<vmem>>, %arg10: memref<16x128xbf16, #tpu.memory_space<vmem>>) attributes {dimension_semantics = [#tpu.dimension_semantics<parallel>], iteration_bounds = array<i64: 1>, scalar_prefetch = 0 : i64, scratch_operands = 0 : i64, tpu.core_type = #tpu.core_type<tc>, window_params = [{transform_indices = @transform_0, window_bounds = array<i64: 16, 128>}, {transform_indices = @transform_1, window_bounds = array<i64: 16, 128>}, {pipeline_mode = #tpu.pipeline_mode<synchronous>, transform_indices = @transform_2, window_bounds = array<i64: 128, 32>}, {pipeline_mode = #tpu.pipeline_mode<synchronous>, transform_indices = @transform_3, window_bounds = array<i64: 128, 32>}, {pipeline_mode = #tpu.pipeline_mode<synchronous>, transform_indices = @transform_4, window_bounds = array<i64: 1, 32>}, {pipeline_mode = #tpu.pipeline_mode<synchronous>, transform_indices = @transform_5, window_bounds = array<i64: 32, 8>}, {pipeline_mode = #tpu.pipeline_mode<synchronous>, transform_indices = @transform_6, window_bounds = array<i64: 1, 8>}, {pipeline_mode = #tpu.pipeline_mode<synchronous>, transform_indices = @transform_7, window_bounds = array<i64: 8, 128>}, {pipeline_mode = #tpu.pipeline_mode<synchronous>, transform_indices = @transform_8, window_bounds = array<i64: 1, 128>}, {transform_indices = @transform_9, window_bounds = array<i64: 16, 128>}]} {
    %c0 = arith.constant 0 : index
    %c0_0 = arith.constant 0 : index
    %0 = vector.load %arg1[%c0, %c0_0] : memref<16x128xf32, #tpu.memory_space<vmem>>, vector<16x128xf32>
    %1 = arith.truncf %0 : vector<16x128xf32> to vector<16x128xbf16>
    %c0_1 = arith.constant 0 : index
    %c0_2 = arith.constant 0 : index
    %2 = vector.load %arg2[%c0_1, %c0_2] : memref<16x128xf32, #tpu.memory_space<vmem>>, vector<16x128xf32>
    %3 = arith.truncf %2 : vector<16x128xf32> to vector<16x128xbf16>
    %c0_3 = arith.constant 0 : index
    %c0_4 = arith.constant 0 : index
    %4 = vector.load %arg3[%c0_3, %c0_4] : memref<128x32xbf16, #tpu.memory_space<vmem>>, vector<128x32xbf16>
    %cst = arith.constant dense<0.000000e+00> : vector<16x32xf32>
    %5 = tpu.matmul %1, %4, %cst {dimension_numbers = #tpu.dot_dimension_numbers<[1], [0], [0], [1], [0, 0, 1, 1], [], []>} : vector<16x128xbf16>, vector<128x32xbf16>, vector<16x32xf32> -> vector<16x32xf32>
    %c0_5 = arith.constant 0 : index
    %c0_6 = arith.constant 0 : index
    %6 = vector.load %arg4[%c0_5, %c0_6] : memref<128x32xbf16, #tpu.memory_space<vmem>>, vector<128x32xbf16>
    %cst_7 = arith.constant dense<0.000000e+00> : vector<16x32xf32>
    %7 = tpu.matmul %3, %6, %cst_7 {dimension_numbers = #tpu.dot_dimension_numbers<[1], [0], [0], [1], [0, 0, 1, 1], [], []>} : vector<16x128xbf16>, vector<128x32xbf16>, vector<16x32xf32> -> vector<16x32xf32>
    %8 = arith.addf %5, %7 : vector<16x32xf32>
    %c0_8 = arith.constant 0 : index
    %c0_9 = arith.constant 0 : index
    %9 = vector.load %arg5[%c0_8, %c0_9] : memref<1x32xf32, #tpu.memory_space<vmem>>, vector<1x32xf32>
    %10 = vector.broadcast %9 : vector<1x32xf32> to vector<16x32xf32>
    %11 = arith.addf %8, %10 : vector<16x32xf32>
    %cst_10 = arith.constant 0.000000e+00 : f32
    %12 = vector.broadcast %cst_10 : f32 to vector<16x32xf32>
    %13 = arith.maximumf %11, %12 : vector<16x32xf32>
    %14 = arith.truncf %13 : vector<16x32xf32> to vector<16x32xbf16>
    %c0_11 = arith.constant 0 : index
    %c0_12 = arith.constant 0 : index
    %15 = vector.load %arg6[%c0_11, %c0_12] : memref<32x8xbf16, #tpu.memory_space<vmem>>, vector<32x8xbf16>
    %cst_13 = arith.constant dense<0.000000e+00> : vector<16x8xf32>
    %16 = tpu.matmul %14, %15, %cst_13 {dimension_numbers = #tpu.dot_dimension_numbers<[1], [0], [0], [1], [0, 0, 1, 1], [], []>} : vector<16x32xbf16>, vector<32x8xbf16>, vector<16x8xf32> -> vector<16x8xf32>
    %c0_14 = arith.constant 0 : index
    %c0_15 = arith.constant 0 : index
    %17 = vector.load %arg7[%c0_14, %c0_15] : memref<1x8xf32, #tpu.memory_space<vmem>>, vector<1x8xf32>
    %18 = vector.broadcast %17 : vector<1x8xf32> to vector<16x8xf32>
    %19 = arith.addf %16, %18 : vector<16x8xf32>
    %cst_16 = arith.constant 0.000000e+00 : f32
    %20 = vector.broadcast %cst_16 : f32 to vector<16x8xf32>
    %21 = arith.maximumf %19, %20 : vector<16x8xf32>
    %22 = arith.truncf %21 : vector<16x8xf32> to vector<16x8xbf16>
    %c0_17 = arith.constant 0 : index
    %c0_18 = arith.constant 0 : index
    %23 = vector.load %arg8[%c0_17, %c0_18] : memref<8x128xbf16, #tpu.memory_space<vmem>>, vector<8x128xbf16>
    %cst_19 = arith.constant dense<0.000000e+00> : vector<16x128xf32>
    %24 = tpu.matmul %22, %23, %cst_19 {dimension_numbers = #tpu.dot_dimension_numbers<[1], [0], [0], [1], [0, 0, 1, 1], [], []>} : vector<16x8xbf16>, vector<8x128xbf16>, vector<16x128xf32> -> vector<16x128xf32>
    %c0_20 = arith.constant 0 : index
    %c0_21 = arith.constant 0 : index
    %25 = vector.load %arg9[%c0_20, %c0_21] : memref<1x128xf32, #tpu.memory_space<vmem>>, vector<1x128xf32>
    %26 = vector.broadcast %25 : vector<1x128xf32> to vector<16x128xf32>
    %27 = arith.addf %24, %26 : vector<16x128xf32>
    %cst_22 = arith.constant 0.000000e+00 : f32
    %28 = vector.broadcast %cst_22 : f32 to vector<16x128xf32>
    %29 = arith.maximumf %27, %28 : vector<16x128xf32>
    %30 = arith.truncf %29 : vector<16x128xf32> to vector<16x128xbf16>
    %c0_23 = arith.constant 0 : index
    %c0_24 = arith.constant 0 : index
    %31 = vector.load %arg10[%c0_23, %c0_24] : memref<16x128xbf16, #tpu.memory_space<vmem>>, vector<16x128xbf16>
    tpu.vector_store %arg10[%c0_23, %c0_24], %30 {strides = array<i32>} : memref<16x128xbf16, #tpu.memory_space<vmem>>, vector<16x128xbf16>,
    return
  }
  func.func @transform_0(%arg0: i32) -> (i32, i32) {
    %c0_i32 = arith.constant 0 : i32
    %c0_i32_0 = arith.constant 0 : i32
    return %arg0, %c0_i32 : i32, i32
  }
  func.func @transform_1(%arg0: i32) -> (i32, i32) {
    %c0_i32 = arith.constant 0 : i32
    %c0_i32_0 = arith.constant 0 : i32
    return %arg0, %c0_i32 : i32, i32
  }
  func.func @transform_2(%arg0: i32) -> (i32, i32) {
    %c0_i32 = arith.constant 0 : i32
    %c0_i32_0 = arith.constant 0 : i32
    %c0_i32_1 = arith.constant 0 : i32
    return %c0_i32, %c0_i32_0 : i32, i32
  }
  func.func @transform_3(%arg0: i32) -> (i32, i32) {
    %c0_i32 = arith.constant 0 : i32
    %c0_i32_0 = arith.constant 0 : i32
    %c0_i32_1 = arith.constant 0 : i32
    return %c0_i32, %c0_i32_0 : i32, i32
  }
  func.func @transform_4(%arg0: i32) -> (i32, i32) {
    %c0_i32 = arith.constant 0 : i32
    %c0_i32_0 = arith.constant 0 : i32
    %c0_i32_1 = arith.constant 0 : i32
    return %c0_i32, %c0_i32_0 : i32, i32
  }
  func.func @transform_5(%arg0: i32) -> (i32, i32) {
    %c0_i32 = arith.constant 0 : i32
    %c0_i32_0 = arith.constant 0 : i32
    %c0_i32_1 = arith.constant 0 : i32
    return %c0_i32, %c0_i32_0 : i32, i32
  }
  func.func @transform_6(%arg0: i32) -> (i32, i32) {
    %c0_i32 = arith.constant 0 : i32
    %c0_i32_0 = arith.constant 0 : i32
    %c0_i32_1 = arith.constant 0 : i32
    return %c0_i32, %c0_i32_0 : i32, i32
  }
  func.func @transform_7(%arg0: i32) -> (i32, i32) {
    %c0_i32 = arith.constant 0 : i32
    %c0_i32_0 = arith.constant 0 : i32
    %c0_i32_1 = arith.constant 0 : i32
    return %c0_i32, %c0_i32_0 : i32, i32
  }
  func.func @transform_8(%arg0: i32) -> (i32, i32) {
    %c0_i32 = arith.constant 0 : i32
    %c0_i32_0 = arith.constant 0 : i32
    %c0_i32_1 = arith.constant 0 : i32
    return %c0_i32, %c0_i32_0 : i32, i32
  }
  func.func @transform_9(%arg0: i32) -> (i32, i32) {
    %c0_i32 = arith.constant 0 : i32
    %c0_i32_0 = arith.constant 0 : i32
    return %arg0, %c0_i32 : i32, i32
  }
}

</mosaic_0001>

<llo_original>
// kernel: tpu_custom_call.1
$region0: #{tpu_custom_call.1}
  #allocation0 [shape = 'u32[]', space=smem, size = 0x4, offset = 0x4, fixed_abs, tag = 'smem constant byte address 0x4 - core index']
  #allocation1 [shape = 'u32[144,128]{1,0:T(1,128)}', space=vmem, size = 0x12000, scoped, tag = 'internal scratch']
  %s0 = inlined_call_operand.vmem [shape: f32[16,128], index: 0, kind: input, shape index: {}]
  %s1 = inlined_call_operand.vmem [shape: f32[16,128], index: 1, kind: input, shape index: {}]
  %s2 = inlined_call_operand.vmem [shape: bf16[128,32], index: 2, kind: input, shape index: {}]
  %s3 = inlined_call_operand.vmem [shape: bf16[128,32], index: 3, kind: input, shape index: {}]
  %s4 = inlined_call_operand.vmem [shape: f32[1,32], index: 4, kind: input, shape index: {}]
  %s5 = inlined_call_operand.vmem [shape: bf16[32,8], index: 5, kind: input, shape index: {}]
  %s6 = inlined_call_operand.vmem [shape: f32[1,8], index: 6, kind: input, shape index: {}]
  %s7 = inlined_call_operand.vmem [shape: bf16[8,128], index: 7, kind: input, shape index: {}]
  %s8 = inlined_call_operand.vmem [shape: f32[1,128], index: 8, kind: input, shape index: {}]
  %s9 = inlined_call_operand.hbm [shape: bf16[16,128], index: 9, kind: output, shape index: {}]
  %s10 = sld [smem:[#allocation0]]
  $region46: #{tpu_custom_call.1} parent=0
    _
  %s12 = ssub.s32 1, %s10
  %s13 = scalar_select 0, %s12, %s10
  $region1: #{tpu_custom_call.1} parent=0
    #allocation2 [shape = 'u8[4096]{0}', space=vmem, size = 0x1000, scoped, tag = 'output window, operand 0, single buffered']
    #allocation3 [shape = 's32[1]{0}', space=sflag, size = 0x4, scoped, tag = 'scoped memory for tpu_custom_call.1']
    %14 = vsyncpa [#allocation3], 0
    // Predicated region
    $region2: #{tpu_custom_call.1} parent=1 // pred_check
      _
    $region3: #{tpu_custom_call.1} parent=1 // pred_check_branch
      %16 = sbr.rel (0) target = $region5
    $region4: #{tpu_custom_call.1} parent=1 // pred_region
      _
    $region5: #{tpu_custom_call.1} parent=1 // pred_fallthru
      _
    // Predicated region
    $region6: #{tpu_custom_call.1} parent=1 // pred_check
      _
    $region7: #{tpu_custom_call.1} parent=1 // pred_check_branch
      %18 = sbr.rel (0) target = $region9
    $region8: #{tpu_custom_call.1} parent=1 // pred_region
      _
    $region9: #{tpu_custom_call.1} parent=1 // pred_fallthru
      _
    // Predicated region
    $region10: #{tpu_custom_call.1} parent=1 // pred_check
      _
    $region11: #{tpu_custom_call.1} parent=1 // pred_check_branch
      %20 = sbr.rel (0) target = $region13
    $region12: #{tpu_custom_call.1} parent=1 // pred_region
      _
    $region13: #{tpu_custom_call.1} parent=1 // pred_fallthru
      _
    // Predicated region
    $region14: #{tpu_custom_call.1} parent=1 // pred_check
      _
    $region15: #{tpu_custom_call.1} parent=1 // pred_check_branch
      %22 = sbr.rel (0) target = $region17
    $region16: #{tpu_custom_call.1} parent=1 // pred_region
      _
    $region17: #{tpu_custom_call.1} parent=1 // pred_fallthru
      _
    // Predicated region
    $region18: #{tpu_custom_call.1} parent=1 // pred_check
      _
    $region19: #{tpu_custom_call.1} parent=1 // pred_check_branch
      %24 = sbr.rel (0) target = $region21
    $region20: #{tpu_custom_call.1} parent=1 // pred_region
      _
    $region21: #{tpu_custom_call.1} parent=1 // pred_fallthru
      _
    // Predicated region
    $region22: #{tpu_custom_call.1} parent=1 // pred_check
      _
    $region23: #{tpu_custom_call.1} parent=1 // pred_check_branch
      %26 = sbr.rel (0) target = $region25
    $region24: #{tpu_custom_call.1} parent=1 // pred_region
      _
    $region25: #{tpu_custom_call.1} parent=1 // pred_fallthru
      _
    // Predicated region
    $region26: #{tpu_custom_call.1} parent=1 // pred_check
      _
    $region27: #{tpu_custom_call.1} parent=1 // pred_check_branch
      %28 = sbr.rel (0) target = $region29
    $region28: #{tpu_custom_call.1} parent=1 // pred_region
      _
    $region29: #{tpu_custom_call.1} parent=1 // pred_fallthru
      _
    // Predicated region
    $region30: #{tpu_custom_call.1} parent=1 // pred_check
      _
    $region31: #{tpu_custom_call.1} parent=1 // pred_check_branch
      %30 = sbr.rel (0) target = $region33
    $region32: #{tpu_custom_call.1} parent=1 // pred_region
      _
    $region33: #{tpu_custom_call.1} parent=1 // pred_fallthru
      _
    // Predicated region
    $region34: #{tpu_custom_call.1} parent=1 // pred_check
      _
    $region35: #{tpu_custom_call.1} parent=1 // pred_check_branch
      %32 = sbr.rel (0) target = $region37
    $region36: #{tpu_custom_call.1} parent=1 // pred_region
      _
    $region37: #{tpu_custom_call.1} parent=1 // pred_fallthru
      _
    %v34 = vld [vmem:[%s0] sm:$0xff]
    %v35 = vld [vmem:[%s0 + $0x8] sm:$0xff]
    %v36 = vpack.c.bf16 %v35, %v34
    %v37 = vld [vmem:[%s1] sm:$0xff]
    %v38 = vld [vmem:[%s1 + $0x8] sm:$0xff]
    %v39 = vpack.c.bf16 %v38, %v37
    %v40 = vld [vmem:[%s2] sm:$0xf]
    %v41 = vld [vmem:[%s2 + $0x4] sm:$0xf]
    %v42 = vld [vmem:[%s2 + $0x8] sm:$0xf]
    %v43 = vld [vmem:[%s2 + $0xc] sm:$0xf]
    %v44 = vld [vmem:[%s2 + $0x10] sm:$0xf]
    %v45 = vld [vmem:[%s2 + $0x14] sm:$0xf]
    %v46 = vld [vmem:[%s2 + $0x18] sm:$0xf]
    %v47 = vld [vmem:[%s2 + $0x1c] sm:$0xf]
    %v48 = vld [vmem:[%s2 + $0x20] sm:$0xf]
    %v49 = vld [vmem:[%s2 + $0x24] sm:$0xf]
    %v50 = vld [vmem:[%s2 + $0x28] sm:$0xf]
    %v51 = vld [vmem:[%s2 + $0x2c] sm:$0xf]
    %v52 = vld [vmem:[%s2 + $0x30] sm:$0xf]
    %v53 = vld [vmem:[%s2 + $0x34] sm:$0xf]
    %v54 = vld [vmem:[%s2 + $0x38] sm:$0xf]
    %v55 = vld [vmem:[%s2 + $0x3c] sm:$0xf]
    %v56 = vld [vmem:[%s3] sm:$0xf]
    %v57 = vld [vmem:[%s3 + $0x4] sm:$0xf]
    %v58 = vld [vmem:[%s3 + $0x8] sm:$0xf]
    %v59 = vld [vmem:[%s3 + $0xc] sm:$0xf]
    %v60 = vld [vmem:[%s3 + $0x10] sm:$0xf]
    %v61 = vld [vmem:[%s3 + $0x14] sm:$0xf]
    %v62 = vld [vmem:[%s3 + $0x18] sm:$0xf]
    %v63 = vld [vmem:[%s3 + $0x1c] sm:$0xf]
    %v64 = vld [vmem:[%s3 + $0x20] sm:$0xf]
    %v65 = vld [vmem:[%s3 + $0x24] sm:$0xf]
    %v66 = vld [vmem:[%s3 + $0x28] sm:$0xf]
    %v67 = vld [vmem:[%s3 + $0x2c] sm:$0xf]
    %v68 = vld [vmem:[%s3 + $0x30] sm:$0xf]
    %v69 = vld [vmem:[%s3 + $0x34] sm:$0xf]
    %v70 = vld [vmem:[%s3 + $0x38] sm:$0xf]
    %v71 = vld [vmem:[%s3 + $0x3c] sm:$0xf]
    %v88 = vunpack.c.l.b16 %v56
    %v89 = vunpack.c.l.b16 %v57
    %v90 = vunpack.c.l.b16 %v58
    %v91 = vunpack.c.l.b16 %v59
    %v92 = vunpack.c.l.b16 %v60
    %v93 = vunpack.c.l.b16 %v61
    %v94 = vunpack.c.l.b16 %v62
    %v95 = vunpack.c.l.b16 %v63
    %v96 = vunpack.c.l.b16 %v64
    %v97 = vunpack.c.l.b16 %v65
    %v98 = vunpack.c.l.b16 %v66
    %v99 = vunpack.c.l.b16 %v67
    %v100 = vunpack.c.l.b16 %v68
    %v101 = vunpack.c.l.b16 %v69
    %v102 = vunpack.c.l.b16 %v70
    %v103 = vunpack.c.l.b16 %v71
    %v104 = vpack.c.b16 %v89, %v88
    %v105 = vpack.c.b16 %v91, %v90
    %v106 = vpack.c.b16 %v93, %v92
    %v107 = vpack.c.b16 %v95, %v94
    %v108 = vpack.c.b16 %v97, %v96
    %v109 = vpack.c.b16 %v99, %v98
    %v110 = vpack.c.b16 %v101, %v100
    %v111 = vpack.c.b16 %v103, %v102
    %120 = vmatprep.subr.bf16.mxu0 0
    %121 = vmatpush1.bf16.msra.mxu0 %v104
    %122 = vmatprep.subr.bf16.mxu0 0
    %123 = vmatpush1.bf16.msra.mxu0 %v105
    %124 = vmatprep.subr.bf16.mxu0 0
    %125 = vmatpush1.bf16.msra.mxu0 %v106
    %126 = vmatprep.subr.bf16.mxu0 0
    %127 = vmatpush1.bf16.msra.mxu0 %v107
    %128 = vmatprep.subr.bf16.mxu0 0
    %129 = vmatpush1.bf16.msra.mxu0 %v108
    %130 = vmatprep.subr.bf16.mxu0 0
    %131 = vmatpush1.bf16.msra.mxu0 %v109
    %132 = vmatprep.subr.bf16.mxu0 0
    %133 = vmatpush1.bf16.msra.mxu0 %v110
    %134 = vmatprep.subr.bf16.mxu0 0
    %135 = vmatpush1.bf16.msra.mxu0 %v111
    %136 = vmatprep.subr.bf16.mxu0 0
    %137 = vmatpush1.bf16.msra.mxu0 0
    %138 = vmatprep.subr.bf16.mxu0 0
    %139 = vmatpush1.bf16.msra.mxu0 0
    %140 = vmatprep.subr.bf16.mxu0 0
    %141 = vmatpush1.bf16.msra.mxu0 0
    %142 = vmatprep.subr.bf16.mxu0 0
    %143 = vmatpush1.bf16.msra.mxu0 0
    %144 = vmatprep.subr.bf16.mxu0 0
    %145 = vmatpush1.bf16.msra.mxu0 0
    %146 = vmatprep.subr.bf16.mxu0 0
    %147 = vmatpush1.bf16.msra.mxu0 0
    %148 = vmatprep.subr.bf16.mxu0 0
    %149 = vmatpush1.bf16.msra.mxu0 0
    %150 = vmatprep.subr.bf16.mxu0 0
    %151 = vmatpush1.bf16.msra.mxu0 0
    %152 = vmatprep.mubr.bf16.mxu0 0
    %153 = vmatmul.mubr.bf16.gmra.mrb[0].mxu0 %v39
    %v154 = vpop.f32.mrb[0].mxu0
    %v155 = vadd.f32 0.0, %v154
    %v156 = vpop.f32.mrb[0].mxu0
    %v157 = vpop.f32.mrb[0].mxu0
    %v158 = vadd.f32 0.0, %v157
    %v159 = vpop.f32.mrb[0].mxu0
    %160 = vdwg.mxu0
    %v177 = vunpack.c.l.b16 %v40
    %v178 = vunpack.c.l.b16 %v41
    %v179 = vunpack.c.l.b16 %v42
    %v180 = vunpack.c.l.b16 %v43
    %v181 = vunpack.c.l.b16 %v44
    %v182 = vunpack.c.l.b16 %v45
    %v183 = vunpack.c.l.b16 %v46
    %v184 = vunpack.c.l.b16 %v47
    %v185 = vunpack.c.l.b16 %v48
    %v186 = vunpack.c.l.b16 %v49
    %v187 = vunpack.c.l.b16 %v50
    %v188 = vunpack.c.l.b16 %v51
    %v189 = vunpack.c.l.b16 %v52
    %v190 = vunpack.c.l.b16 %v53
    %v191 = vunpack.c.l.b16 %v54
    %v192 = vunpack.c.l.b16 %v55
    %v193 = vpack.c.b16 %v178, %v177
    %v194 = vpack.c.b16 %v180, %v179
    %v195 = vpack.c.b16 %v182, %v181
    %v196 = vpack.c.b16 %v184, %v183
    %v197 = vpack.c.b16 %v186, %v185
    %v198 = vpack.c.b16 %v188, %v187
    %v199 = vpack.c.b16 %v190, %v189
    %v200 = vpack.c.b16 %v192, %v191
    %209 = vmatprep.subr.bf16.mxu0 0
    %210 = vmatpush1.bf16.msra.mxu0 %v193
    %211 = vmatprep.subr.bf16.mxu0 0
    %212 = vmatpush1.bf16.msra.mxu0 %v194
    %213 = vmatprep.subr.bf16.mxu0 0
    %214 = vmatpush1.bf16.msra.mxu0 %v195
    %215 = vmatprep.subr.bf16.mxu0 0
    %216 = vmatpush1.bf16.msra.mxu0 %v196
    %217 = vmatprep.subr.bf16.mxu0 0
    %218 = vmatpush1.bf16.msra.mxu0 %v197
    %219 = vmatprep.subr.bf16.mxu0 0
    %220 = vmatpush1.bf16.msra.mxu0 %v198
    %221 = vmatprep.subr.bf16.mxu0 0
    %222 = vmatpush1.bf16.msra.mxu0 %v199
    %223 = vmatprep.subr.bf16.mxu0 0
    %224 = vmatpush1.bf16.msra.mxu0 %v200
    %225 = vmatprep.subr.bf16.mxu0 0
    %226 = vmatpush1.bf16.msra.mxu0 0
    %227 = vmatprep.subr.bf16.mxu0 0
    %228 = vmatpush1.bf16.msra.mxu0 0
    %229 = vmatprep.subr.bf16.mxu0 0
    %230 = vmatpush1.bf16.msra.mxu0 0
    %231 = vmatprep.subr.bf16.mxu0 0
    %232 = vmatpush1.bf16.msra.mxu0 0
    %233 = vmatprep.subr.bf16.mxu0 0
    %234 = vmatpush1.bf16.msra.mxu0 0
    %235 = vmatprep.subr.bf16.mxu0 0
    %236 = vmatpush1.bf16.msra.mxu0 0
    %237 = vmatprep.subr.bf16.mxu0 0
    %238 = vmatpush1.bf16.msra.mxu0 0
    %239 = vmatprep.subr.bf16.mxu0 0
    %240 = vmatpush1.bf16.msra.mxu0 0
    %241 = vmatprep.mubr.bf16.mxu0 0
    %242 = vmatmul.mubr.bf16.gmra.mrb[0].mxu0 %v36
    %v243 = vpop.f32.mrb[0].mxu0
    %v244 = vadd.f32 %v155, %v243
    %v245 = vpop.f32.mrb[0].mxu0
    %v246 = vpop.f32.mrb[0].mxu0
    %v247 = vadd.f32 %v158, %v246
    %v248 = vpop.f32.mrb[0].mxu0
    %249 = vdwg.mxu0
    %v250 = vld [vmem:[%s4] sm:$0x1]
    %v252 = vlaneseq
    %v253 = vshrl.u32 %v252, 7
    %v254 = vsub.s32 0, %v253
    %v255 = vrot.slane %v250, %v254
    %v257 = vadd.f32 %v244, %v255
    %v258 = vadd.f32 %v247, %v255
    %v259 = vmax.f32 %v257, 0.0
    %v260 = vmax.f32 %v258, 0.0
    %v261 = vpack.c.bf16 %v260, %v259
    %v262 = vld [vmem:[%s5] sm:$0xf]
    %v263 = vld [vmem:[%s5 + $0x4] sm:$0xf]
    %v264 = vld [vmem:[%s5 + $0x8] sm:$0xf]
    %v265 = vld [vmem:[%s5 + $0xc] sm:$0xf]
    %v266 = vld [vmem:[%s6] sm:$0x1]
    %v268 = vlaneseq
    %v269 = vshrl.u32 %v268, 7
    %v270 = vsub.s32 0, %v269
    %v271 = vrot.slane %v266, %v270
    %v277 = vunpack.c.l.b16 %v262
    %v278 = vunpack.c.l.b16 %v263
    %v279 = vunpack.c.l.b16 %v264
    %v280 = vunpack.c.l.b16 %v265
    %v281 = vpack.c.b16 %v278, %v277
    %v282 = vpack.c.b16 %v280, %v279
    %vm285 = vcmask 261120
    %v287 = vsel %vm285, %v261, 0
    %289 = vmatprep.subr.bf16.mxu0 0
    %290 = vmatpush1.bf16.msra.mxu0 %v281
    %291 = vmatprep.subr.bf16.mxu0 0
    %292 = vmatpush1.bf16.msra.mxu0 %v282
    %293 = vmatprep.subr.bf16.mxu0 0
    %294 = vmatpush1.bf16.msra.mxu0 0
    %295 = vmatprep.subr.bf16.mxu0 0
    %296 = vmatpush1.bf16.msra.mxu0 0
    %297 = vmatprep.subr.bf16.mxu0 0
    %298 = vmatpush1.bf16.msra.mxu0 0
    %299 = vmatprep.subr.bf16.mxu0 0
    %300 = vmatpush1.bf16.msra.mxu0 0
    %301 = vmatprep.subr.bf16.mxu0 0
    %302 = vmatpush1.bf16.msra.mxu0 0
    %303 = vmatprep.subr.bf16.mxu0 0
    %304 = vmatpush1.bf16.msra.mxu0 0
    %305 = vmatprep.subr.bf16.mxu0 0
    %306 = vmatpush1.bf16.msra.mxu0 0
    %307 = vmatprep.subr.bf16.mxu0 0
    %308 = vmatpush1.bf16.msra.mxu0 0
    %309 = vmatprep.subr.bf16.mxu0 0
    %310 = vmatpush1.bf16.msra.mxu0 0
    %311 = vmatprep.subr.bf16.mxu0 0
    %312 = vmatpush1.bf16.msra.mxu0 0
    %313 = vmatprep.subr.bf16.mxu0 0
    %314 = vmatpush1.bf16.msra.mxu0 0
    %315 = vmatprep.subr.bf16.mxu0 0
    %316 = vmatpush1.bf16.msra.mxu0 0
    %317 = vmatprep.subr.bf16.mxu0 0
    %318 = vmatpush1.bf16.msra.mxu0 0
    %319 = vmatprep.subr.bf16.mxu0 0
    %320 = vmatpush1.bf16.msra.mxu0 0
    %321 = vmatprep.mubr.bf16.mxu0 0
    %322 = vmatmul.mubr.bf16.gmra.mrb[0].mxu0 %v287
    %v323 = vpop.f32.mrb[0].mxu0
    %v324 = vadd.f32 %v271, %v323
    %v325 = vpop.f32.mrb[0].mxu0
    %v326 = vpop.f32.mrb[0].mxu0
    %v327 = vadd.f32 %v271, %v326
    %v328 = vpop.f32.mrb[0].mxu0
    %329 = vdwg.mxu0
    %v330 = vmax.f32 %v324, 0.0
    %v331 = vmax.f32 %v327, 0.0
    %v332 = vpack.c.bf16 %v331, %v330
    %v333 = vld [vmem:[%s7] sm:$0xf]
    %v334 = vld [vmem:[%s8] sm:$0x1]
    %v336 = vlaneseq
    %v337 = vshrl.u32 %v336, 7
    %v338 = vsub.s32 0, %v337
    %v339 = vrot.slane %v334, %v338
    %vm341 = vcmask 64512
    %v343 = vsel %vm341, %v332, 0
    %vm345 = vcmask 1043456
    %v347 = vsel %vm345, %v333, 0
    %349 = vmatprep.subr.bf16.mxu0 0
    %350 = vmatpush1.bf16.msra.mxu0 %v347
    %351 = vmatprep.subr.bf16.mxu0 0
    %352 = vmatpush1.bf16.msra.mxu0 0
    %353 = vmatprep.subr.bf16.mxu0 0
    %354 = vmatpush1.bf16.msra.mxu0 0
    %355 = vmatprep.subr.bf16.mxu0 0
    %356 = vmatpush1.bf16.msra.mxu0 0
    %357 = vmatprep.subr.bf16.mxu0 0
    %358 = vmatpush1.bf16.msra.mxu0 0
    %359 = vmatprep.subr.bf16.mxu0 0
    %360 = vmatpush1.bf16.msra.mxu0 0
    %361 = vmatprep.subr.bf16.mxu0 0
    %362 = vmatpush1.bf16.msra.mxu0 0
    %363 = vmatprep.subr.bf16.mxu0 0
    %364 = vmatpush1.bf16.msra.mxu0 0
    %365 = vmatprep.subr.bf16.mxu0 0
    %366 = vmatpush1.bf16.msra.mxu0 0
    %367 = vmatprep.subr.bf16.mxu0 0
    %368 = vmatpush1.bf16.msra.mxu0 0
    %369 = vmatprep.subr.bf16.mxu0 0
    %370 = vmatpush1.bf16.msra.mxu0 0
    %371 = vmatprep.subr.bf16.mxu0 0
    %372 = vmatpush1.bf16.msra.mxu0 0
    %373 = vmatprep.subr.bf16.mxu0 0
    %374 = vmatpush1.bf16.msra.mxu0 0
    %375 = vmatprep.subr.bf16.mxu0 0
    %376 = vmatpush1.bf16.msra.mxu0 0
    %377 = vmatprep.subr.bf16.mxu0 0
    %378 = vmatpush1.bf16.msra.mxu0 0
    %379 = vmatprep.subr.bf16.mxu0 0
    %380 = vmatpush1.bf16.msra.mxu0 0
    %381 = vmatprep.mubr.bf16.mxu0 0
    %382 = vmatmul.mubr.bf16.gmra.mrb[0].mxu0 %v343
    %v383 = vpop.f32.mrb[0].mxu0
    %v384 = vadd.f32 %v339, %v383
    %v385 = vpop.f32.mrb[0].mxu0
    %v386 = vpop.f32.mrb[0].mxu0
    %v387 = vadd.f32 %v339, %v386
    %v388 = vpop.f32.mrb[0].mxu0
    %389 = vdwg.mxu0
    %v390 = vmax.f32 %v384, 0.0
    %v391 = vmax.f32 %v387, 0.0
    %v392 = vpack.c.bf16 %v391, %v390
    %v394 = vunpack.c.l.b16 %v392
    %v395 = vunpack.c.h.b16 %v392
    %v396 = vpack.c.b16 %v394, %v394
    %v397 = vpack.c.b16 %v395, %v395
    %400 = vst [vmem:[#allocation2] sm:$0xf] %v396
    %401 = vst [vmem:[#allocation2 + $0x4] sm:$0xf] %v397
    // Predicated region
    $region38: #{tpu_custom_call.1} parent=1 // pred_check
      _
    $region39: #{tpu_custom_call.1} parent=1 // pred_check_branch
      %403 = sbr.rel (0) target = $region41
    $region40: #{tpu_custom_call.1} parent=1 // pred_region
      %s405 = ssub.s32 128, 128
      %406 = vsyncadd [#allocation3], %s405
      %s407 = sshll.u32 [#allocation2], 4
      %s408 = int_to_ptr.vmem [resolvable:$true] %s407
      %413 = dma.vmem_to_hbm [thread:$0]  %s408, 128, %s9, [#allocation3], 64, 64, 4
    $region41: #{tpu_custom_call.1} parent=1 // pred_fallthru
      _
    // Predicated region
    $region42: #{tpu_custom_call.1} parent=1 // pred_check
      _
    $region43: #{tpu_custom_call.1} parent=1 // pred_check_branch
      %415 = sbr.rel (0) target = $region45
    $region44: #{tpu_custom_call.1} parent=1 // pred_region
      %416 = dma.done [#allocation3], 128
    $region45: #{tpu_custom_call.1} parent=1 // pred_fallthru
      _
    %417 = vsyncpa [#allocation3], 1

// kernel: tpu_custom_call.1
$region0: #{tpu_custom_call.1}
  #allocation0 [shape = 'u32[]', space=smem, size = 0x4, offset = 0x4, fixed_abs, tag = 'smem constant byte address 0x4 - core index']
  #allocation1 [shape = 'u32[144,128]{1,0:T(1,128)}', space=vmem, size = 0x12000, scoped, tag = 'internal scratch']
  %s0 = inlined_call_operand.vmem [shape: f32[16,128], index: 0, kind: input, shape index: {}]
  %s1 = inlined_call_operand.vmem [shape: f32[16,128], index: 1, kind: input, shape index: {}]
  %s2 = inlined_call_operand.vmem [shape: bf16[128,32], index: 2, kind: input, shape index: {}]
  %s3 = inlined_call_operand.vmem [shape: bf16[128,32], index: 3, kind: input, shape index: {}]
  %s4 = inlined_call_operand.vmem [shape: f32[1,32], index: 4, kind: input, shape index: {}]
  %s5 = inlined_call_operand.vmem [shape: bf16[32,8], index: 5, kind: input, shape index: {}]
  %s6 = inlined_call_operand.vmem [shape: f32[1,8], index: 6, kind: input, shape index: {}]
  %s7 = inlined_call_operand.vmem [shape: bf16[8,128], index: 7, kind: input, shape index: {}]
  %s8 = inlined_call_operand.vmem [shape: f32[1,128], index: 8, kind: input, shape index: {}]
  %s9 = inlined_call_operand.hbm [shape: bf16[16,128], index: 9, kind: output, shape index: {}]
  %s10 = sld [smem:[#allocation0]]
  $region46: #{tpu_custom_call.1} parent=0
    _
  %s12 = ssub.s32 1, %s10
  %s13 = scalar_select 0, %s12, %s10
  $region1: #{tpu_custom_call.1} parent=0
    #allocation2 [shape = 'u8[4096]{0}', space=vmem, size = 0x1000, scoped, tag = 'output window, operand 0, single buffered']
    #allocation3 [shape = 's32[1]{0}', space=sflag, size = 0x4, scoped, tag = 'scoped memory for tpu_custom_call.1']
    %14 = vsyncpa [#allocation3], 0
    // Predicated region
    $region2: #{tpu_custom_call.1} parent=1 // pred_check
      _
    $region3: #{tpu_custom_call.1} parent=1 // pred_check_branch
      %16 = sbr.rel (0) target = $region5
    $region4: #{tpu_custom_call.1} parent=1 // pred_region
      _
    $region5: #{tpu_custom_call.1} parent=1 // pred_fallthru
      _
    // Predicated region
    $region6: #{tpu_custom_call.1} parent=1 // pred_check
      _
    $region7: #{tpu_custom_call.1} parent=1 // pred_check_branch
      %18 = sbr.rel (0) target = $region9
    $region8: #{tpu_custom_call.1} parent=1 // pred_region
      _
    $region9: #{tpu_custom_call.1} parent=1 // pred_fallthru
      _
    // Predicated region
    $region10: #{tpu_custom_call.1} parent=1 // pred_check
      _
    $region11: #{tpu_custom_call.1} parent=1 // pred_check_branch
      %20 = sbr.rel (0) target = $region13
    $region12: #{tpu_custom_call.1} parent=1 // pred_region
      _
    $region13: #{tpu_custom_call.1} parent=1 // pred_fallthru
      _
    // Predicated region
    $region14: #{tpu_custom_call.1} parent=1 // pred_check
      _
    $region15: #{tpu_custom_call.1} parent=1 // pred_check_branch
      %22 = sbr.rel (0) target = $region17
    $region16: #{tpu_custom_call.1} parent=1 // pred_region
      _
    $region17: #{tpu_custom_call.1} parent=1 // pred_fallthru
      _
    // Predicated region
    $region18: #{tpu_custom_call.1} parent=1 // pred_check
      _
    $region19: #{tpu_custom_call.1} parent=1 // pred_check_branch
      %24 = sbr.rel (0) target = $region21
    $region20: #{tpu_custom_call.1} parent=1 // pred_region
      _
    $region21: #{tpu_custom_call.1} parent=1 // pred_fallthru
      _
    // Predicated region
    $region22: #{tpu_custom_call.1} parent=1 // pred_check
      _
    $region23: #{tpu_custom_call.1} parent=1 // pred_check_branch
      %26 = sbr.rel (0) target = $region25
    $region24: #{tpu_custom_call.1} parent=1 // pred_region
      _
    $region25: #{tpu_custom_call.1} parent=1 // pred_fallthru
      _
    // Predicated region
    $region26: #{tpu_custom_call.1} parent=1 // pred_check
      _
    $region27: #{tpu_custom_call.1} parent=1 // pred_check_branch
      %28 = sbr.rel (0) target = $region29
    $region28: #{tpu_custom_call.1} parent=1 // pred_region
      _
    $region29: #{tpu_custom_call.1} parent=1 // pred_fallthru
      _
    // Predicated region
    $region30: #{tpu_custom_call.1} parent=1 // pred_check
      _
    $region31: #{tpu_custom_call.1} parent=1 // pred_check_branch
      %30 = sbr.rel (0) target = $region33
    $region32: #{tpu_custom_call.1} parent=1 // pred_region
      _
    $region33: #{tpu_custom_call.1} parent=1 // pred_fallthru
      _
    // Predicated region
    $region34: #{tpu_custom_call.1} parent=1 // pred_check
      _
    $region35: #{tpu_custom_call.1} parent=1 // pred_check_branch
      %32 = sbr.rel (0) target = $region37
    $region36: #{tpu_custom_call.1} parent=1 // pred_region
      _
    $region37: #{tpu_custom_call.1} parent=1 // pred_fallthru
      _
    %v34 = vld [vmem:[%s0] sm:$0xff]
    %v35 = vld [vmem:[%s0 + $0x8] sm:$0xff]
    %v36 = vpack.c.bf16 %v35, %v34
    %v37 = vld [vmem:[%s1] sm:$0xff]
    %v38 = vld [vmem:[%s1 + $0x8] sm:$0xff]
    %v39 = vpack.c.bf16 %v38, %v37
    %v40 = vld [vmem:[%s2] sm:$0xf]
    %v41 = vld [vmem:[%s2 + $0x4] sm:$0xf]
    %v42 = vld [vmem:[%s2 + $0x8] sm:$0xf]
    %v43 = vld [vmem:[%s2 + $0xc] sm:$0xf]
    %v44 = vld [vmem:[%s2 + $0x10] sm:$0xf]
    %v45 = vld [vmem:[%s2 + $0x14] sm:$0xf]
    %v46 = vld [vmem:[%s2 + $0x18] sm:$0xf]
    %v47 = vld [vmem:[%s2 + $0x1c] sm:$0xf]
    %v48 = vld [vmem:[%s2 + $0x20] sm:$0xf]
    %v49 = vld [vmem:[%s2 + $0x24] sm:$0xf]
    %v50 = vld [vmem:[%s2 + $0x28] sm:$0xf]
    %v51 = vld [vmem:[%s2 + $0x2c] sm:$0xf]
    %v52 = vld [vmem:[%s2 + $0x30] sm:$0xf]
    %v53 = vld [vmem:[%s2 + $0x34] sm:$0xf]
    %v54 = vld [vmem:[%s2 + $0x38] sm:$0xf]
    %v55 = vld [vmem:[%s2 + $0x3c] sm:$0xf]
    %v56 = vld [vmem:[%s3] sm:$0xf]
    %v57 = vld [vmem:[%s3 + $0x4] sm:$0xf]
    %v58 = vld [vmem:[%s3 + $0x8] sm:$0xf]
    %v59 = vld [vmem:[%s3 + $0xc] sm:$0xf]
    %v60 = vld [vmem:[%s3 + $0x10] sm:$0xf]
    %v61 = vld [vmem:[%s3 + $0x14] sm:$0xf]
    %v62 = vld [vmem:[%s3 + $0x18] sm:$0xf]
    %v63 = vld [vmem:[%s3 + $0x1c] sm:$0xf]
    %v64 = vld [vmem:[%s3 + $0x20] sm:$0xf]
    %v65 = vld [vmem:[%s3 + $0x24] sm:$0xf]
    %v66 = vld [vmem:[%s3 + $0x28] sm:$0xf]
    %v67 = vld [vmem:[%s3 + $0x2c] sm:$0xf]
    %v68 = vld [vmem:[%s3 + $0x30] sm:$0xf]
    %v69 = vld [vmem:[%s3 + $0x34] sm:$0xf]
    %v70 = vld [vmem:[%s3 + $0x38] sm:$0xf]
    %v71 = vld [vmem:[%s3 + $0x3c] sm:$0xf]
    %v88 = vunpack.c.l.b16 %v56
    %v89 = vunpack.c.l.b16 %v57
    %v90 = vunpack.c.l.b16 %v58
    %v91 = vunpack.c.l.b16 %v59
    %v92 = vunpack.c.l.b16 %v60
    %v93 = vunpack.c.l.b16 %v61
    %v94 = vunpack.c.l.b16 %v62
    %v95 = vunpack.c.l.b16 %v63
    %v96 = vunpack.c.l.b16 %v64
    %v97 = vunpack.c.l.b16 %v65
    %v98 = vunpack.c.l.b16 %v66
    %v99 = vunpack.c.l.b16 %v67
    %v100 = vunpack.c.l.b16 %v68
    %v101 = vunpack.c.l.b16 %v69
    %v102 = vunpack.c.l.b16 %v70
    %v103 = vunpack.c.l.b16 %v71
    %v104 = vpack.c.b16 %v89, %v88
    %v105 = vpack.c.b16 %v91, %v90
    %v106 = vpack.c.b16 %v93, %v92
    %v107 = vpack.c.b16 %v95, %v94
    %v108 = vpack.c.b16 %v97, %v96
    %v109 = vpack.c.b16 %v99, %v98
    %v110 = vpack.c.b16 %v101, %v100
    %v111 = vpack.c.b16 %v103, %v102
    %120 = vmatprep.subr.bf16.mxu0 0
    %121 = vmatpush1.bf16.msra.mxu0 %v104
    %122 = vmatprep.subr.bf16.mxu0 0
    %123 = vmatpush1.bf16.msra.mxu0 %v105
    %124 = vmatprep.subr.bf16.mxu0 0
    %125 = vmatpush1.bf16.msra.mxu0 %v106
    %126 = vmatprep.subr.bf16.mxu0 0
    %127 = vmatpush1.bf16.msra.mxu0 %v107
    %128 = vmatprep.subr.bf16.mxu0 0
    %129 = vmatpush1.bf16.msra.mxu0 %v108
    %130 = vmatprep.subr.bf16.mxu0 0
    %131 = vmatpush1.bf16.msra.mxu0 %v109
    %132 = vmatprep.subr.bf16.mxu0 0
    %133 = vmatpush1.bf16.msra.mxu0 %v110
    %134 = vmatprep.subr.bf16.mxu0 0
    %135 = vmatpush1.bf16.msra.mxu0 %v111
    %136 = vmatprep.subr.bf16.mxu0 0
    %137 = vmatpush1.bf16.msra.mxu0 0
    %138 = vmatprep.subr.bf16.mxu0 0
    %139 = vmatpush1.bf16.msra.mxu0 0
    %140 = vmatprep.subr.bf16.mxu0 0
    %141 = vmatpush1.bf16.msra.mxu0 0
    %142 = vmatprep.subr.bf16.mxu0 0
    %143 = vmatpush1.bf16.msra.mxu0 0
    %144 = vmatprep.subr.bf16.mxu0 0
    %145 = vmatpush1.bf16.msra.mxu0 0
    %146 = vmatprep.subr.bf16.mxu0 0
    %147 = vmatpush1.bf16.msra.mxu0 0
    %148 = vmatprep.subr.bf16.mxu0 0
    %149 = vmatpush1.bf16.msra.mxu0 0
    %150 = vmatprep.subr.bf16.mxu0 0
    %151 = vmatpush1.bf16.msra.mxu0 0
    %152 = vmatprep.mubr.bf16.mxu0 0
    %153 = vmatmul.mubr.bf16.gmra.mrb[0].mxu0 %v39
    %v154 = vpop.f32.mrb[0].mxu0
    %v155 = vadd.f32 0.0, %v154
    %v156 = vpop.f32.mrb[0].mxu0
    %v157 = vpop.f32.mrb[0].mxu0
    %v158 = vadd.f32 0.0, %v157
    %v159 = vpop.f32.mrb[0].mxu0
    %160 = vdwg.mxu0
    %v177 = vunpack.c.l.b16 %v40
    %v178 = vunpack.c.l.b16 %v41
    %v179 = vunpack.c.l.b16 %v42
    %v180 = vunpack.c.l.b16 %v43
    %v181 = vunpack.c.l.b16 %v44
    %v182 = vunpack.c.l.b16 %v45
    %v183 = vunpack.c.l.b16 %v46
    %v184 = vunpack.c.l.b16 %v47
    %v185 = vunpack.c.l.b16 %v48
    %v186 = vunpack.c.l.b16 %v49
    %v187 = vunpack.c.l.b16 %v50
    %v188 = vunpack.c.l.b16 %v51
    %v189 = vunpack.c.l.b16 %v52
    %v190 = vunpack.c.l.b16 %v53
    %v191 = vunpack.c.l.b16 %v54
    %v192 = vunpack.c.l.b16 %v55
    %v193 = vpack.c.b16 %v178, %v177
    %v194 = vpack.c.b16 %v180, %v179
    %v195 = vpack.c.b16 %v182, %v181
    %v196 = vpack.c.b16 %v184, %v183
    %v197 = vpack.c.b16 %v186, %v185
    %v198 = vpack.c.b16 %v188, %v187
    %v199 = vpack.c.b16 %v190, %v189
    %v200 = vpack.c.b16 %v192, %v191
    %209 = vmatprep.subr.bf16.mxu0 0
    %210 = vmatpush1.bf16.msra.mxu0 %v193
    %211 = vmatprep.subr.bf16.mxu0 0
    %212 = vmatpush1.bf16.msra.mxu0 %v194
    %213 = vmatprep.subr.bf16.mxu0 0
    %214 = vmatpush1.bf16.msra.mxu0 %v195
    %215 = vmatprep.subr.bf16.mxu0 0
    %216 = vmatpush1.bf16.msra.mxu0 %v196
    %217 = vmatprep.subr.bf16.mxu0 0
    %218 = vmatpush1.bf16.msra.mxu0 %v197
    %219 = vmatprep.subr.bf16.mxu0 0
    %220 = vmatpush1.bf16.msra.mxu0 %v198
    %221 = vmatprep.subr.bf16.mxu0 0
    %222 = vmatpush1.bf16.msra.mxu0 %v199
    %223 = vmatprep.subr.bf16.mxu0 0
    %224 = vmatpush1.bf16.msra.mxu0 %v200
    %225 = vmatprep.subr.bf16.mxu0 0
    %226 = vmatpush1.bf16.msra.mxu0 0
    %227 = vmatprep.subr.bf16.mxu0 0
    %228 = vmatpush1.bf16.msra.mxu0 0
    %229 = vmatprep.subr.bf16.mxu0 0
    %230 = vmatpush1.bf16.msra.mxu0 0
    %231 = vmatprep.subr.bf16.mxu0 0
    %232 = vmatpush1.bf16.msra.mxu0 0
    %233 = vmatprep.subr.bf16.mxu0 0
    %234 = vmatpush1.bf16.msra.mxu0 0
    %235 = vmatprep.subr.bf16.mxu0 0
    %236 = vmatpush1.bf16.msra.mxu0 0
    %237 = vmatprep.subr.bf16.mxu0 0
    %238 = vmatpush1.bf16.msra.mxu0 0
    %239 = vmatprep.subr.bf16.mxu0 0
    %240 = vmatpush1.bf16.msra.mxu0 0
    %241 = vmatprep.mubr.bf16.mxu0 0
    %242 = vmatmul.mubr.bf16.gmra.mrb[0].mxu0 %v36
    %v243 = vpop.f32.mrb[0].mxu0
    %v244 = vadd.f32 %v155, %v243
    %v245 = vpop.f32.mrb[0].mxu0
    %v246 = vpop.f32.mrb[0].mxu0
    %v247 = vadd.f32 %v158, %v246
    %v248 = vpop.f32.mrb[0].mxu0
    %249 = vdwg.mxu0
    %v250 = vld [vmem:[%s4] sm:$0x1]
    %v252 = vlaneseq
    %v253 = vshrl.u32 %v252, 7
    %v254 = vsub.s32 0, %v253
    %v255 = vrot.slane %v250, %v254
    %v257 = vadd.f32 %v244, %v255
    %v258 = vadd.f32 %v247, %v255
    %v259 = vmax.f32 %v257, 0.0
    %v260 = vmax.f32 %v258, 0.0
    %v261 = vpack.c.bf16 %v260, %v259
    %v262 = vld [vmem:[%s5] sm:$0xf]
    %v263 = vld [vmem:[%s5 + $0x4] sm:$0xf]
    %v264 = vld [vmem:[%s5 + $0x8] sm:$0xf]
    %v265 = vld [vmem:[%s5 + $0xc] sm:$0xf]
    %v266 = vld [vmem:[%s6] sm:$0x1]
    %v268 = vlaneseq
    %v269 = vshrl.u32 %v268, 7
    %v270 = vsub.s32 0, %v269
    %v271 = vrot.slane %v266, %v270
    %v277 = vunpack.c.l.b16 %v262
    %v278 = vunpack.c.l.b16 %v263
    %v279 = vunpack.c.l.b16 %v264
    %v280 = vunpack.c.l.b16 %v265
    %v281 = vpack.c.b16 %v278, %v277
    %v282 = vpack.c.b16 %v280, %v279
    %vm285 = vcmask 261120
    %v287 = vsel %vm285, %v261, 0
    %289 = vmatprep.subr.bf16.mxu0 0
    %290 = vmatpush1.bf16.msra.mxu0 %v281
    %291 = vmatprep.subr.bf16.mxu0 0
    %292 = vmatpush1.bf16.msra.mxu0 %v282
    %293 = vmatprep.subr.bf16.mxu0 0
    %294 = vmatpush1.bf16.msra.mxu0 0
    %295 = vmatprep.subr.bf16.mxu0 0
    %296 = vmatpush1.bf16.msra.mxu0 0
    %297 = vmatprep.subr.bf16.mxu0 0
    %298 = vmatpush1.bf16.msra.mxu0 0
    %299 = vmatprep.subr.bf16.mxu0 0
    %300 = vmatpush1.bf16.msra.mxu0 0
    %301 = vmatprep.subr.bf16.mxu0 0
    %302 = vmatpush1.bf16.msra.mxu0 0
    %303 = vmatprep.subr.bf16.mxu0 0
    %304 = vmatpush1.bf16.msra.mxu0 0
    %305 = vmatprep.subr.bf16.mxu0 0
    %306 = vmatpush1.bf16.msra.mxu0 0
    %307 = vmatprep.subr.bf16.mxu0 0
    %308 = vmatpush1.bf16.msra.mxu0 0
    %309 = vmatprep.subr.bf16.mxu0 0
    %310 = vmatpush1.bf16.msra.mxu0 0
    %311 = vmatprep.subr.bf16.mxu0 0
    %312 = vmatpush1.bf16.msra.mxu0 0
    %313 = vmatprep.subr.bf16.mxu0 0
    %314 = vmatpush1.bf16.msra.mxu0 0
    %315 = vmatprep.subr.bf16.mxu0 0
    %316 = vmatpush1.bf16.msra.mxu0 0
    %317 = vmatprep.subr.bf16.mxu0 0
    %318 = vmatpush1.bf16.msra.mxu0 0
    %319 = vmatprep.subr.bf16.mxu0 0
    %320 = vmatpush1.bf16.msra.mxu0 0
    %321 = vmatprep.mubr.bf16.mxu0 0
    %322 = vmatmul.mubr.bf16.gmra.mrb[0].mxu0 %v287
    %v323 = vpop.f32.mrb[0].mxu0
    %v324 = vadd.f32 %v271, %v323
    %v325 = vpop.f32.mrb[0].mxu0
    %v326 = vpop.f32.mrb[0].mxu0
    %v327 = vadd.f32 %v271, %v326
    %v328 = vpop.f32.mrb[0].mxu0
    %329 = vdwg.mxu0
    %v330 = vmax.f32 %v324, 0.0
    %v331 = vmax.f32 %v327, 0.0
    %v332 = vpack.c.bf16 %v331, %v330
    %v333 = vld [vmem:[%s7] sm:$0xf]
    %v334 = vld [vmem:[%s8] sm:$0x1]
    %v336 = vlaneseq
    %v337 = vshrl.u32 %v336, 7
    %v338 = vsub.s32 0, %v337
    %v339 = vrot.slane %v334, %v338
    %vm341 = vcmask 64512
    %v343 = vsel %vm341, %v332, 0
    %vm345 = vcmask 1043456
    %v347 = vsel %vm345, %v333, 0
    %349 = vmatprep.subr.bf16.mxu0 0
    %350 = vmatpush1.bf16.msra.mxu0 %v347
    %351 = vmatprep.subr.bf16.mxu0 0
    %352 = vmatpush1.bf16.msra.mxu0 0
    %353 = vmatprep.subr.bf16.mxu0 0
    %354 = vmatpush1.bf16.msra.mxu0 0
    %355 = vmatprep.subr.bf16.mxu0 0
    %356 = vmatpush1.bf16.msra.mxu0 0
    %357 = vmatprep.subr.bf16.mxu0 0
    %358 = vmatpush1.bf16.msra.mxu0 0
    %359 = vmatprep.subr.bf16.mxu0 0
    %360 = vmatpush1.bf16.msra.mxu0 0
    %361 = vmatprep.subr.bf16.mxu0 0
    %362 = vmatpush1.bf16.msra.mxu0 0
    %363 = vmatprep.subr.bf16.mxu0 0
    %364 = vmatpush1.bf16.msra.mxu0 0
    %365 = vmatprep.subr.bf16.mxu0 0
    %366 = vmatpush1.bf16.msra.mxu0 0
    %367 = vmatprep.subr.bf16.mxu0 0
    %368 = vmatpush1.bf16.msra.mxu0 0
    %369 = vmatprep.subr.bf16.mxu0 0
    %370 = vmatpush1.bf16.msra.mxu0 0
    %371 = vmatprep.subr.bf16.mxu0 0
    %372 = vmatpush1.bf16.msra.mxu0 0
    %373 = vmatprep.subr.bf16.mxu0 0
    %374 = vmatpush1.bf16.msra.mxu0 0
    %375 = vmatprep.subr.bf16.mxu0 0
    %376 = vmatpush1.bf16.msra.mxu0 0
    %377 = vmatprep.subr.bf16.mxu0 0
    %378 = vmatpush1.bf16.msra.mxu0 0
    %379 = vmatprep.subr.bf16.mxu0 0
    %380 = vmatpush1.bf16.msra.mxu0 0
    %381 = vmatprep.mubr.bf16.mxu0 0
    %382 = vmatmul.mubr.bf16.gmra.mrb[0].mxu0 %v343
    %v383 = vpop.f32.mrb[0].mxu0
    %v384 = vadd.f32 %v339, %v383
    %v385 = vpop.f32.mrb[0].mxu0
    %v386 = vpop.f32.mrb[0].mxu0
    %v387 = vadd.f32 %v339, %v386
    %v388 = vpop.f32.mrb[0].mxu0
    %389 = vdwg.mxu0
    %v390 = vmax.f32 %v384, 0.0
    %v391 = vmax.f32 %v387, 0.0
    %v392 = vpack.c.bf16 %v391, %v390
    %v394 = vunpack.c.l.b16 %v392
    %v395 = vunpack.c.h.b16 %v392
    %v396 = vpack.c.b16 %v394, %v394
    %v397 = vpack.c.b16 %v395, %v395
    %400 = vst [vmem:[#allocation2] sm:$0xf] %v396
    %401 = vst [vmem:[#allocation2 + $0x4] sm:$0xf] %v397
    // Predicated region
    $region38: #{tpu_custom_call.1} parent=1 // pred_check
      _
    $region39: #{tpu_custom_call.1} parent=1 // pred_check_branch
      %403 = sbr.rel (0) target = $region41
    $region40: #{tpu_custom_call.1} parent=1 // pred_region
      %s405 = ssub.s32 128, 128
      %406 = vsyncadd [#allocation3], %s405
      %s407 = sshll.u32 [#allocation2], 4
      %s408 = int_to_ptr.vmem [resolvable:$true] %s407
      %413 = dma.vmem_to_hbm [thread:$0]  %s408, 128, %s9, [#allocation3], 64, 64, 4
    $region41: #{tpu_custom_call.1} parent=1 // pred_fallthru
      _
    // Predicated region
    $region42: #{tpu_custom_call.1} parent=1 // pred_check
      _
    $region43: #{tpu_custom_call.1} parent=1 // pred_check_branch
      %415 = sbr.rel (0) target = $region45
    $region44: #{tpu_custom_call.1} parent=1 // pred_region
      %416 = dma.done [#allocation3], 128
    $region45: #{tpu_custom_call.1} parent=1 // pred_fallthru
      _
    %417 = vsyncpa [#allocation3], 1

</llo_original>
